<compile_context>
chip_gen: v7x
topology: tpu7x:2x2x1
jax: 0.10.0
libtpu: 0.0.40
codegen_flags: <defaults>
</compile_context>

<pallas_src>
import jax
import jax.numpy as jnp
from jax import lax
from jax.experimental import pallas as pl
from jax.experimental.pallas import tpu as pltpu

BN_EPS = 1e-5  # PyTorch BatchNorm2d default (momentum only affects running stats)

_BUFFERED = getattr(pl, "Buffered", None)  # single-buffer constants when available


# ---------------------------------------------------------------------------
# BlockSpec helpers
# ---------------------------------------------------------------------------
def _const_spec(block_shape, single_buffer):
    """Spec for an operand whose block index never changes across the grid."""
    index_map = lambda ni, si: (0,) * len(block_shape)
    if single_buffer and _BUFFERED is not None:
        # Constant index_map -> the block is never re-DMA'd, so one buffer is
        # enough; halves VMEM residency of the big weight block.
        return pl.BlockSpec(block_shape, index_map, pipeline_mode=_BUFFERED(1))
    return pl.BlockSpec(block_shape, index_map)


# ---------------------------------------------------------------------------
# Kernel bodies
# ---------------------------------------------------------------------------
def _make_compute_y(D, C, concat):
    """Fused 1x1 conv over the concatenation of D C-channel inputs (one tile)."""

    def compute_y(x_refs, w_ref, xcat_ref):
        if concat:
            # Small C underfills the MXU contraction depth: stage the channel
            # concat in VMEM (cheap vector stores, bf16) and issue a single
            # (DC, DC) x (DC, tile_s) matmul.
            for i in range(D):
                xcat_ref[i * C:(i + 1) * C, :] = x_refs[i][0].astype(jnp.bfloat16)
            return jnp.dot(w_ref[...], xcat_ref[...],
                           preferred_element_type=jnp.float32)
        # Large C: K-split matmul, one K=C dot per input dataset (no concat copy).
        y = None
        for i in range(D):
            part = jnp.dot(w_ref[:, i * C:(i + 1) * C],
                           x_refs[i][0].astype(jnp.bfloat16),
                           preferred_element_type=jnp.float32)
            y = part if y is None else y + part
        return y

    return compute_y


def _make_stats_kernel(D, C, tile_s, lane, concat):
    """Pass 1: accumulate per-channel sum / sum-of-squares of the pre-BN conv."""
    compute_y = _make_compute_y(D, C, concat)

    def kernel(*refs):
        x_refs = refs[:D]               # D x (1, C, tile_s) f32
        w_ref = refs[D]                 # (DC, DC) bf16
        sum_ref = refs[D + 1]           # (DC, lane) f32  resident accumulator
        ssq_ref = refs[D + 2]           # (DC, lane) f32  resident accumulator
        xcat_ref = refs[D + 3] if concat else None

        @pl.when(jnp.logical_and(pl.program_id(0) == 0, pl.program_id(1) == 0))
        def _init():
            sum_ref[...] = jnp.zeros_like(sum_ref)
            ssq_ref[...] = jnp.zeros_like(ssq_ref)

        y = compute_y(x_refs, w_ref, xcat_ref)      # (DC, tile_s) f32

        if lane > 1:
            # Lane-parallel accumulation: static 128-aligned column chunks are
            # pure VALU adds (no per-tile XLU reduction); the cross-lane reduce
            # happens once, in the wrapper, on the tiny (DC, 128) result.
            s_acc = None
            q_acc = None
            for j in range(tile_s // lane):
                blk = y[:, j * lane:(j + 1) * lane]
                s_acc = blk if s_acc is None else s_acc + blk
                q_acc = blk * blk if q_acc is None else q_acc + blk * blk
            sum_ref[...] += s_acc
            ssq_ref[...] += q_acc
        else:
            sum_ref[...] += jnp.sum(y, axis=1, keepdims=True)
            ssq_ref[...] += jnp.sum(y * y, axis=1, keepdims=True)

    return kernel


def _make_norm_kernel(D, C, concat, out_dtype):
    """Pass 2: recompute Y, apply precomputed BN scale/shift + ReLU, store."""
    compute_y = _make_compute_y(D, C, concat)

    def kernel(*refs):
        x_refs = refs[:D]               # D x (1, C, tile_s) f32
        w_ref = refs[D]                 # (DC, DC) bf16
        scale_ref = refs[D + 1]         # (DC, 1) f32
        shift_ref = refs[D + 2]         # (DC, 1) f32
        o_ref = refs[D + 3]             # (D, 1, C, tile_s) out_dtype
        xcat_ref = refs[D + 4] if concat else None

        y = compute_y(x_refs, w_ref, xcat_ref)                     # (DC, tile_s)
        out = jnp.maximum(y * scale_ref[...] + shift_ref[...], 0.0)
        for d in range(D):
            o_ref[d, 0, :, :] = out[d * C:(d + 1) * C, :].astype(out_dtype)

    return kernel


# ---------------------------------------------------------------------------
# Tiling / VMEM budgeting
# ---------------------------------------------------------------------------
def _choose_tiling(D, C, S, in_bytes, out_bytes, max_tile_override=None,
                   vmem_budget=36 * 1024 * 1024, max_tile=2048):
    """Channel-aware spatial tile choice + explicit VMEM limit.

    Returns (tile_s, s_pad, concat, vmem_limit_bytes)."""
    DC = D * C
    concat = C <= 128
    # Conservative (double-buffered) residency estimate so the choice is safe
    # even when pl.Buffered(1) is not honoured.
    fixed = DC * DC * 2 * 2                   # bf16 weight block
    fixed += 2 * DC * 128 * 4 * 2             # BN scale/shift ((DC,1) lane-padded)
    fixed += 2 * DC * 128 * 4                 # resident stats accumulators
    per_elem = D * C * in_bytes * 2 + D * C * out_bytes * 2   # X in + out (2 bufs)
    if concat:
        per_elem += DC * 2                    # bf16 concat scratch
    avail = max(vmem_budget - fixed, per_elem * 128)
    t_max = min(int(avail // per_elem), max_tile)
    t_max = max(t_max - (t_max % 128), 128)   # TODO(synk): DC-tile huge stages
    if max_tile_override is not None:
        t_max = min(t_max, max_tile_override)

    if S <= t_max:
        tile_s, s_pad = S, S                  # full extent, no padding
    else:
        # Search multiples of 128 up to t_max, minimizing padding waste but
        # preferring the largest tile within ~5% extra padding.
        candidates = [(t, (-S) % t) for t in range(128, t_max + 1, 128)]
        min_waste = min(w for _, w in candidates)
        slack = max(min_waste, S // 20)
        tile_s = max(t for t, w in candidates if w <= slack)
        s_pad = ((S + tile_s - 1) // tile_s) * tile_s

    need = fixed + per_elem * tile_s
    # >= 32 MiB scoped (fine on every generation), capped at 48 MiB to stay
    # safely inside v7x's 64 MiB physical VMEM.
    vmem_limit = int(min(max(2 * need, 32 << 20), 48 << 20))
    return tile_s, s_pad, concat, vmem_limit


# ---------------------------------------------------------------------------
# Layer apply: stats pass -> BN params (XLA) -> normalize pass
# ---------------------------------------------------------------------------
def _nddr_layer_apply(xs, w_bf16, gamma, beta, true_count, tile_s, s_pad, lane,
                      concat, out_dtype, vmem_limit, single_buffer_consts):
    """xs: D arrays (N, C, S_pad) f32.  Returns (D, N, C, S_pad) out_dtype."""
    D = len(xs)
    n, C, _ = xs[0].shape
    DC = D * C
    num_s = s_pad // tile_s
    in_bytes = xs[0].dtype.itemsize
    out_bytes = jnp.dtype(out_dtype).itemsize

    x_specs = [pl.BlockSpec((1, C, tile_s), lambda ni, si: (ni, 0, si))
               for _ in range(D)]
    w_spec = _const_spec((DC, DC), single_buffer_consts)
    scratch = [pltpu.VMEM((DC, tile_s), jnp.bfloat16)] if concat else []

    # --- pass 1: per-channel sum / sum-of-squares of the pre-BN conv output ---
    stats_out_spec = pl.BlockSpec((DC, lane), lambda ni, si: (0, 0))
    stats_flops = 2 * n * s_pad * DC * DC
    stats_bytes = n * s_pad * DC * in_bytes + DC * DC * 2 + 2 * DC * lane * 4
    y_sum, y_ssq = pl.pallas_call(
        _make_stats_kernel(D, C, tile_s, lane, concat),
        out_shape=(jax.ShapeDtypeStruct((DC, lane), jnp.float32),
                   jax.ShapeDtypeStruct((DC, lane), jnp.float32)),
        grid_spec=pltpu.PrefetchScalarGridSpec(
            num_scalar_prefetch=0,
            grid=(n, num_s),
            in_specs=x_specs + [w_spec],
            out_specs=[stats_out_spec, stats_out_spec],
            scratch_shapes=list(scratch)),
        compiler_params=pltpu.CompilerParams(
            dimension_semantics=("arbitrary", "arbitrary"),
            vmem_limit_bytes=vmem_limit),
        cost_estimate=pl.CostEstimate(flops=int(stats_flops), transcendentals=0,
                                      bytes_accessed=int(stats_bytes)),
    )(*xs, w_bf16)

    # BN batch statistics -> per-channel scale/shift (tiny XLA ops, done once).
    # NOTE: single-pass E[y^2]-mean^2 in f32; guarded against negative var.
    inv_count = 1.0 / float(true_count)
    mean = jnp.sum(y_sum, axis=1) * inv_count                     # (DC,)
    var = jnp.maximum(jnp.sum(y_ssq, axis=1) * inv_count - mean * mean, 0.0)
    inv_std = lax.rsqrt(var + BN_EPS)
    scale = (gamma * inv_std).reshape(DC, 1).astype(jnp.float32)
    shift = (beta - mean * gamma * inv_std).reshape(DC, 1).astype(jnp.float32)

    # --- pass 2: normalize + ReLU (megacore-parallel friendly) ---------------
    vec_spec = _const_spec((DC, 1), single_buffer_consts)
    out_spec = pl.BlockSpec((D, 1, C, tile_s), lambda ni, si: (0, ni, 0, si))
    norm_flops = 2 * n * s_pad * DC * DC
    norm_bytes = n * s_pad * DC * (in_bytes + out_bytes) + DC * DC * 2
    out = pl.pallas_call(
        _make_norm_kernel(D, C, concat, out_dtype),
        out_shape=jax.ShapeDtypeStruct((D, n, C, s_pad), out_dtype),
        grid_spec=pltpu.PrefetchScalarGridSpec(
            num_scalar_prefetch=0,
            grid=(n, num_s),
            in_specs=x_specs + [w_spec, vec_spec, vec_spec],
            out_specs=out_spec,
            scratch_shapes=list(scratch)),
        compiler_params=pltpu.CompilerParams(
            dimension_semantics=("parallel", "parallel"),
            vmem_limit_bytes=vmem_limit),
        cost_estimate=pl.CostEstimate(flops=int(norm_flops), transcendentals=0,
                                      bytes_accessed=int(norm_bytes)),
    )(*xs, w_bf16, scale, shift)
    return out


# ---------------------------------------------------------------------------
# Module-level wrappers
# ---------------------------------------------------------------------------
class NDDRLayerPallas:
    """JAX/Pallas port of NDDRLayer (training-path semantics, use_se=False)."""

    def __init__(self, datasets, channels, alpha, beta, use_se=False,
                 out_dtype=None):
        # TODO(synk): ChannelSE is an injected external module not defined in
        # the source; only the use_se=False path is implemented (SE treated as
        # identity).  Eval-mode (running-stats) BN path is also not modeled.
        assert not use_se
        self.datasets = list(datasets)
        self.channels = channels
        self.D = len(self.datasets)
        D, C = self.D, channels
        DC = D * C
        # PyTorch init: conv weight for output dataset d is beta*I in every
        # input-channel block and alpha*I in its own block d.
        mix = beta * jnp.ones((D, D), jnp.float32) + \
            (alpha - beta) * jnp.eye(D, dtype=jnp.float32)
        self.w_all_f32 = jnp.kron(mix, jnp.eye(C, dtype=jnp.float32))  # (DC, DC)
        # bf16 for the MXU (alpha/beta round to bf16; reference mirrors this).
        self.w_bf16 = self.w_all_f32.astype(jnp.bfloat16)
        self.gamma = jnp.ones((DC,), jnp.float32)       # BN weight.fill_(1.0)
        self.beta_bn = jnp.zeros((DC,), jnp.float32)    # BN bias.fill_(0.0)
        self.out_dtype = out_dtype                      # None -> match input dtype
        self.force_tile_s = None                        # test hook (multiple of 128)

    def __call__(self, x):
        D, C = self.D, self.channels
        xs = [x[d] for d in self.datasets]
        n, c, h, w = xs[0].shape
        assert c == C
        s = h * w
        out_dtype = self.out_dtype if self.out_dtype is not None else xs[0].dtype
        # NCHW-native: reshape is metadata-only; the bf16 cast happens in-kernel.
        xs = [xi.reshape(n, C, s) for xi in xs]
        tile_s, s_pad, concat, vmem_limit = _choose_tiling(
            D, C, s, in_bytes=xs[0].dtype.itemsize,
            out_bytes=jnp.dtype(out_dtype).itemsize,
            max_tile_override=self.force_tile_s)
        if s_pad != s:
            # Padding is now minimized (<=~5% waste); zero columns contribute
            # nothing to the BN sums and the divisor uses the true count.
            # TODO(synk): in-kernel lane mask would drop this copy entirely.
            xs = [jnp.pad(xi, ((0, 0), (0, 0), (0, s_pad - s))) for xi in xs]
        lane = 128 if tile_s % 128 == 0 else 1

        def run(single_buffer):
            return _nddr_layer_apply(
                xs, self.w_bf16, self.gamma, self.beta_bn, true_count=n * s,
                tile_s=tile_s, s_pad=s_pad, lane=lane, concat=concat,
                out_dtype=out_dtype, vmem_limit=vmem_limit,
                single_buffer_consts=single_buffer)

        try:
            out = run(True)                 # single-buffered constant operands
        except Exception:                   # older jax without Buffered(1)
            out = run(False)

        result = {}
        for i, d in enumerate(self.datasets):
            result[d] = out[i, :, :, :s].reshape(n, C, h, w)
        return result


class NDDRCNNPallas:
    """Structural port of NDDRCNN's per-stage NDDR sharing (training features)."""

    def __init__(self, datasets, stages, channels, alpha, beta, use_se=False,
                 return_layers=None):
        self.datasets = list(datasets)
        self.stages = list(stages)
        self.nddr = {s: NDDRLayerPallas(datasets, channels[s], alpha, beta, use_se)
                     for s in stages}
        self.return_layers = return_layers or {d: list(stages) for d in self.datasets}

    def forward_train_features(self, data):
        # data: dict dset -> NCHW features (output of the per-dataset stem).
        return_features = {k: {} for k in self.datasets}
        for i, stage in enumerate(self.stages):
            # TODO(synk): backbone body stage (models[dset].backbone.body.<stage>),
            # get_origin_size / get_sharing_size / resize_features, FPN and task
            # heads are injected external modules; feature maps are assumed to
            # already share spatial size (resize is the identity here).
            data = self.nddr[stage](data)
            for dset in self.datasets:
                if stage in self.return_layers[dset]:
                    return_features[dset][str(i)] = data[dset]
        return return_features


# ---------------------------------------------------------------------------
# Pure-JAX reference (mirrors the kernel's bf16-matmul / f32-BN numerics)
# ---------------------------------------------------------------------------
def reference_nddr(x_dict, layer):
    D, C = layer.D, layer.channels
    xs = [x_dict[d] for d in layer.datasets]
    n, c, h, w = xs[0].shape
    xc = jnp.concatenate([xi.reshape(n, c, h * w) for xi in xs], axis=1)
    xc = xc.astype(jnp.bfloat16)
    y = jnp.einsum("oc,ncs->nos", layer.w_all_f32.astype(jnp.bfloat16), xc,
                   preferred_element_type=jnp.float32)              # (N, DC, S)
    mean = jnp.mean(y, axis=(0, 2), keepdims=True)
    var = jnp.mean(jnp.square(y - mean), axis=(0, 2), keepdims=True)
    yn = (y - mean) * lax.rsqrt(var + BN_EPS)
    yn = yn * layer.gamma.reshape(1, D * C, 1) + layer.beta_bn.reshape(1, D * C, 1)
    yn = jnp.maximum(yn, 0.0)
    return {d: yn[:, i * C:(i + 1) * C, :].reshape(n, C, h, w)
            for i, d in enumerate(layer.datasets)}


if __name__ == "__main__":
    key = jax.random.PRNGKey(0)
    datasets = ["clf", "seg"]
    stages = ["layer1", "layer2"]
    channels = {"layer1": 16, "layer2": 16}
    alpha, beta = 0.9, 0.1
    N, H, W = 2, 16, 16

    model = NDDRCNNPallas(datasets, stages, channels, alpha, beta, use_se=False)

    k1, k2, k3, k4 = jax.random.split(key, 4)
    data = {
        "clf": jax.random.normal(k1, (N, 16, H, W), jnp.float32),
        "seg": jax.random.normal(k2, (N, 16, H, W), jnp.float32),
    }

    # Structural forward (per-stage NDDR sharing).
    feats = model.forward_train_features(data)
    jax.block_until_ready(feats)

    # 1) single spatial tile (tile_s == S, lane-parallel stats accumulation)
    layer = model.nddr["layer1"]
    out0 = layer(data)
    ref0 = reference_nddr(data, layer)
    for d in datasets:
        assert jnp.allclose(out0[d], ref0[d], atol=1e-3, rtol=1e-3), f"mismatch {d}"

    # 2) forced multi-tile path (stats accumulated across spatial tiles)
    layer.force_tile_s = 128
    out1 = layer(data)
    layer.force_tile_s = None
    for d in datasets:
        assert jnp.allclose(out1[d], ref0[d], atol=1e-3, rtol=1e-3), f"mismatch {d}"

    # 3) non-128-multiple spatial extent (full-extent tile, lane=1 stats path)
    #    and a forced ragged/padded tiling of the same input.
    small_layer = NDDRLayerPallas(datasets, 8, alpha, beta)
    small = {"clf": jax.random.normal(k3, (N, 8, 12, 12), jnp.float32),
             "seg": jax.random.normal(k4, (N, 8, 12, 12), jnp.float32)}
    out2 = small_layer(small)
    ref2 = reference_nddr(small, small_layer)
    for d in datasets:
        assert jnp.allclose(out2[d], ref2[d], atol=1e-3, rtol=1e-3), f"mismatch {d}"
    small_layer.force_tile_s = 128        # S=144 -> padded to 256, 2 tiles
    out3 = small_layer(small)
    small_layer.force_tile_s = None
    for d in datasets:
        assert jnp.allclose(out3[d], ref2[d], atol=1e-3, rtol=1e-3), f"mismatch {d}"

    # 4) bf16 output mode (halves the dominant HBM writeback stream)
    bf16_layer = NDDRLayerPallas(datasets, 16, alpha, beta, out_dtype=jnp.bfloat16)
    out4 = bf16_layer(data)
    for d in datasets:
        assert out4[d].dtype == jnp.bfloat16
        assert jnp.allclose(out4[d].astype(jnp.float32), ref0[d],
                            atol=3e-2, rtol=3e-2), f"mismatch {d}"

    print("KERNEL_OK")
</pallas_src>

<mosaic_0001>
module attributes {stable_mosaic.version = 11 : i64} {
  func.func @kernel(%arg0: i32, %arg1: i32, %arg2: memref<1x16x256xf32, #tpu.memory_space<vmem>>, %arg3: memref<1x16x256xf32, #tpu.memory_space<vmem>>, %arg4: memref<32x32xbf16, #tpu.memory_space<vmem>>, %arg5: memref<32x128xf32, #tpu.memory_space<vmem>>, %arg6: memref<32x128xf32, #tpu.memory_space<vmem>>, %arg7: memref<32x256xbf16, #tpu.memory_space<vmem>>) attributes {dimension_semantics = [#tpu.dimension_semantics<arbitrary>, #tpu.dimension_semantics<arbitrary>], iteration_bounds = array<i64: 2, 1>, scalar_prefetch = 0 : i64, scratch_operands = 1 : i64, tpu.core_type = #tpu.core_type<tc>, window_params = [{transform_indices = @transform_0, window_bounds = array<i64: 1, 16, 256>}, {transform_indices = @transform_1, window_bounds = array<i64: 1, 16, 256>}, {pipeline_mode = #tpu.pipeline_mode<synchronous>, transform_indices = @transform_2, window_bounds = array<i64: 32, 32>}, {pipeline_mode = #tpu.pipeline_mode<synchronous>, transform_indices = @transform_3, window_bounds = array<i64: 32, 128>}, {pipeline_mode = #tpu.pipeline_mode<synchronous>, transform_indices = @transform_4, window_bounds = array<i64: 32, 128>}]} {
    %c0_i32 = arith.constant 0 : i32
    %0 = arith.cmpi eq, %arg0, %c0_i32 : i32
    %c0_i32_0 = arith.constant 0 : i32
    %1 = arith.cmpi eq, %arg1, %c0_i32_0 : i32
    %2 = arith.andi %0, %1 : i1
    %3 = arith.extui %2 : i1 to i32
    %c0_i32_1 = arith.constant 0 : i32
    %4 = arith.cmpi ne, %3, %c0_i32_1 : i32
    scf.if %4 {
      %cst_22 = arith.constant 0.000000e+00 : f32
      %28 = vector.broadcast %cst_22 : f32 to vector<32x128xf32>
      %c0_23 = arith.constant 0 : index
      %c0_24 = arith.constant 0 : index
      %29 = vector.load %arg5[%c0_23, %c0_24] : memref<32x128xf32, #tpu.memory_space<vmem>>, vector<32x128xf32>
      tpu.vector_store %arg5[%c0_23, %c0_24], %28 {strides = array<i32>} : memref<32x128xf32, #tpu.memory_space<vmem>>, vector<32x128xf32>,
      %cst_25 = arith.constant 0.000000e+00 : f32
      %30 = vector.broadcast %cst_25 : f32 to vector<32x128xf32>
      %c0_26 = arith.constant 0 : index
      %c0_27 = arith.constant 0 : index
      %31 = vector.load %arg6[%c0_26, %c0_27] : memref<32x128xf32, #tpu.memory_space<vmem>>, vector<32x128xf32>
      tpu.vector_store %arg6[%c0_26, %c0_27], %30 {strides = array<i32>} : memref<32x128xf32, #tpu.memory_space<vmem>>, vector<32x128xf32>,
    } else {
    }
    %c0 = arith.constant 0 : index
    %c0_2 = arith.constant 0 : index
    %c0_3 = arith.constant 0 : index
    %5 = vector.load %arg2[%c0, %c0_2, %c0_3] : memref<1x16x256xf32, #tpu.memory_space<vmem>>, vector<1x16x256xf32>
    %6 = vector.shape_cast %5 : vector<1x16x256xf32> to vector<16x256xf32>
    %7 = arith.truncf %6 : vector<16x256xf32> to vector<16x256xbf16>
    %c0_4 = arith.constant 0 : index
    %c0_5 = arith.constant 0 : index
    %8 = vector.load %arg7[%c0_4, %c0_5] : memref<32x256xbf16, #tpu.memory_space<vmem>>, vector<16x256xbf16>
    tpu.vector_store %arg7[%c0_4, %c0_5], %7 {strides = array<i32>} : memref<32x256xbf16, #tpu.memory_space<vmem>>, vector<16x256xbf16>,
    %c0_6 = arith.constant 0 : index
    %c0_7 = arith.constant 0 : index
    %c0_8 = arith.constant 0 : index
    %9 = vector.load %arg3[%c0_6, %c0_7, %c0_8] : memref<1x16x256xf32, #tpu.memory_space<vmem>>, vector<1x16x256xf32>
    %10 = vector.shape_cast %9 : vector<1x16x256xf32> to vector<16x256xf32>
    %11 = arith.truncf %10 : vector<16x256xf32> to vector<16x256xbf16>
    %c16 = arith.constant 16 : index
    %c0_9 = arith.constant 0 : index
    %12 = vector.load %arg7[%c16, %c0_9] : memref<32x256xbf16, #tpu.memory_space<vmem>>, vector<16x256xbf16>
    tpu.vector_store %arg7[%c16, %c0_9], %11 {strides = array<i32>} : memref<32x256xbf16, #tpu.memory_space<vmem>>, vector<16x256xbf16>,
    %c0_10 = arith.constant 0 : index
    %c0_11 = arith.constant 0 : index
    %13 = vector.load %arg4[%c0_10, %c0_11] : memref<32x32xbf16, #tpu.memory_space<vmem>>, vector<32x32xbf16>
    %c0_12 = arith.constant 0 : index
    %c0_13 = arith.constant 0 : index
    %14 = vector.load %arg7[%c0_12, %c0_13] : memref<32x256xbf16, #tpu.memory_space<vmem>>, vector<32x256xbf16>
    %cst = arith.constant dense<0.000000e+00> : vector<32x256xf32>
    %15 = tpu.matmul %13, %14, %cst {dimension_numbers = #tpu.dot_dimension_numbers<[1], [0], [0], [1], [0, 0, 1, 1], [], []>} : vector<32x32xbf16>, vector<32x256xbf16>, vector<32x256xf32> -> vector<32x256xf32>
    %16 = vector.extract_strided_slice %15 {offsets = [0, 0], sizes = [32, 128], strides = [1, 1]} : vector<32x256xf32> to vector<32x128xf32>
    %17 = arith.mulf %16, %16 : vector<32x128xf32>
    %18 = vector.extract_strided_slice %15 {offsets = [0, 128], sizes = [32, 128], strides = [1, 1]} : vector<32x256xf32> to vector<32x128xf32>
    %19 = arith.addf %16, %18 : vector<32x128xf32>
    %20 = arith.mulf %18, %18 : vector<32x128xf32>
    %21 = arith.addf %17, %20 : vector<32x128xf32>
    %c0_14 = arith.constant 0 : index
    %c0_15 = arith.constant 0 : index
    %22 = vector.load %arg5[%c0_14, %c0_15] : memref<32x128xf32, #tpu.memory_space<vmem>>, vector<32x128xf32>
    %23 = arith.addf %22, %19 : vector<32x128xf32>
    %c0_16 = arith.constant 0 : index
    %c0_17 = arith.constant 0 : index
    %24 = vector.load %arg5[%c0_16, %c0_17] : memref<32x128xf32, #tpu.memory_space<vmem>>, vector<32x128xf32>
    tpu.vector_store %arg5[%c0_16, %c0_17], %23 {strides = array<i32>} : memref<32x128xf32, #tpu.memory_space<vmem>>, vector<32x128xf32>,
    %c0_18 = arith.constant 0 : index
    %c0_19 = arith.constant 0 : index
    %25 = vector.load %arg6[%c0_18, %c0_19] : memref<32x128xf32, #tpu.memory_space<vmem>>, vector<32x128xf32>
    %26 = arith.addf %25, %21 : vector<32x128xf32>
    %c0_20 = arith.constant 0 : index
    %c0_21 = arith.constant 0 : index
    %27 = vector.load %arg6[%c0_20, %c0_21] : memref<32x128xf32, #tpu.memory_space<vmem>>, vector<32x128xf32>
    tpu.vector_store %arg6[%c0_20, %c0_21], %26 {strides = array<i32>} : memref<32x128xf32, #tpu.memory_space<vmem>>, vector<32x128xf32>,
    return
  }
  func.func @transform_0(%arg0: i32, %arg1: i32) -> (i32, i32, i32) {
    %c0_i32 = arith.constant 0 : i32
    %c0_i32_0 = arith.constant 0 : i32
    return %arg0, %c0_i32, %arg1 : i32, i32, i32
  }
  func.func @transform_1(%arg0: i32, %arg1: i32) -> (i32, i32, i32) {
    %c0_i32 = arith.constant 0 : i32
    %c0_i32_0 = arith.constant 0 : i32
    return %arg0, %c0_i32, %arg1 : i32, i32, i32
  }
  func.func @transform_2(%arg0: i32, %arg1: i32) -> (i32, i32) {
    %c0_i32 = arith.constant 0 : i32
    %c0_i32_0 = arith.constant 0 : i32
    %c0_i32_1 = arith.constant 0 : i32
    return %c0_i32, %c0_i32_0 : i32, i32
  }
  func.func @transform_3(%arg0: i32, %arg1: i32) -> (i32, i32) {
    %c0_i32 = arith.constant 0 : i32
    %c0_i32_0 = arith.constant 0 : i32
    %c0_i32_1 = arith.constant 0 : i32
    return %c0_i32, %c0_i32_0 : i32, i32
  }
  func.func @transform_4(%arg0: i32, %arg1: i32) -> (i32, i32) {
    %c0_i32 = arith.constant 0 : i32
    %c0_i32_0 = arith.constant 0 : i32
    %c0_i32_1 = arith.constant 0 : i32
    return %c0_i32, %c0_i32_0 : i32, i32
  }
}

module attributes {stable_mosaic.version = 11 : i64} {
  func.func @kernel(%arg0: i32, %arg1: i32, %arg2: memref<1x16x256xf32, #tpu.memory_space<vmem>>, %arg3: memref<1x16x256xf32, #tpu.memory_space<vmem>>, %arg4: memref<32x32xbf16, #tpu.memory_space<vmem>>, %arg5: memref<32x128xf32, #tpu.memory_space<vmem>>, %arg6: memref<32x128xf32, #tpu.memory_space<vmem>>, %arg7: memref<32x256xbf16, #tpu.memory_space<vmem>>) attributes {dimension_semantics = [#tpu.dimension_semantics<arbitrary>, #tpu.dimension_semantics<arbitrary>], iteration_bounds = array<i64: 2, 1>, scalar_prefetch = 0 : i64, scratch_operands = 1 : i64, tpu.core_type = #tpu.core_type<tc>, window_params = [{transform_indices = @transform_0, window_bounds = array<i64: 1, 16, 256>}, {transform_indices = @transform_1, window_bounds = array<i64: 1, 16, 256>}, {pipeline_mode = #tpu.pipeline_mode<synchronous>, transform_indices = @transform_2, window_bounds = array<i64: 32, 32>}, {pipeline_mode = #tpu.pipeline_mode<synchronous>, transform_indices = @transform_3, window_bounds = array<i64: 32, 128>}, {pipeline_mode = #tpu.pipeline_mode<synchronous>, transform_indices = @transform_4, window_bounds = array<i64: 32, 128>}]} {
    %c0_i32 = arith.constant 0 : i32
    %0 = arith.cmpi eq, %arg0, %c0_i32 : i32
    %c0_i32_0 = arith.constant 0 : i32
    %1 = arith.cmpi eq, %arg1, %c0_i32_0 : i32
    %2 = arith.andi %0, %1 : i1
    %3 = arith.extui %2 : i1 to i32
    %c0_i32_1 = arith.constant 0 : i32
    %4 = arith.cmpi ne, %3, %c0_i32_1 : i32
    scf.if %4 {
      %cst_22 = arith.constant 0.000000e+00 : f32
      %28 = vector.broadcast %cst_22 : f32 to vector<32x128xf32>
      %c0_23 = arith.constant 0 : index
      %c0_24 = arith.constant 0 : index
      %29 = vector.load %arg5[%c0_23, %c0_24] : memref<32x128xf32, #tpu.memory_space<vmem>>, vector<32x128xf32>
      tpu.vector_store %arg5[%c0_23, %c0_24], %28 {strides = array<i32>} : memref<32x128xf32, #tpu.memory_space<vmem>>, vector<32x128xf32>,
      %cst_25 = arith.constant 0.000000e+00 : f32
      %30 = vector.broadcast %cst_25 : f32 to vector<32x128xf32>
      %c0_26 = arith.constant 0 : index
      %c0_27 = arith.constant 0 : index
      %31 = vector.load %arg6[%c0_26, %c0_27] : memref<32x128xf32, #tpu.memory_space<vmem>>, vector<32x128xf32>
      tpu.vector_store %arg6[%c0_26, %c0_27], %30 {strides = array<i32>} : memref<32x128xf32, #tpu.memory_space<vmem>>, vector<32x128xf32>,
    } else {
    }
    %c0 = arith.constant 0 : index
    %c0_2 = arith.constant 0 : index
    %c0_3 = arith.constant 0 : index
    %5 = vector.load %arg2[%c0, %c0_2, %c0_3] : memref<1x16x256xf32, #tpu.memory_space<vmem>>, vector<1x16x256xf32>
    %6 = vector.shape_cast %5 : vector<1x16x256xf32> to vector<16x256xf32>
    %7 = arith.truncf %6 : vector<16x256xf32> to vector<16x256xbf16>
    %c0_4 = arith.constant 0 : index
    %c0_5 = arith.constant 0 : index
    %8 = vector.load %arg7[%c0_4, %c0_5] : memref<32x256xbf16, #tpu.memory_space<vmem>>, vector<16x256xbf16>
    tpu.vector_store %arg7[%c0_4, %c0_5], %7 {strides = array<i32>} : memref<32x256xbf16, #tpu.memory_space<vmem>>, vector<16x256xbf16>,
    %c0_6 = arith.constant 0 : index
    %c0_7 = arith.constant 0 : index
    %c0_8 = arith.constant 0 : index
    %9 = vector.load %arg3[%c0_6, %c0_7, %c0_8] : memref<1x16x256xf32, #tpu.memory_space<vmem>>, vector<1x16x256xf32>
    %10 = vector.shape_cast %9 : vector<1x16x256xf32> to vector<16x256xf32>
    %11 = arith.truncf %10 : vector<16x256xf32> to vector<16x256xbf16>
    %c16 = arith.constant 16 : index
    %c0_9 = arith.constant 0 : index
    %12 = vector.load %arg7[%c16, %c0_9] : memref<32x256xbf16, #tpu.memory_space<vmem>>, vector<16x256xbf16>
    tpu.vector_store %arg7[%c16, %c0_9], %11 {strides = array<i32>} : memref<32x256xbf16, #tpu.memory_space<vmem>>, vector<16x256xbf16>,
    %c0_10 = arith.constant 0 : index
    %c0_11 = arith.constant 0 : index
    %13 = vector.load %arg4[%c0_10, %c0_11] : memref<32x32xbf16, #tpu.memory_space<vmem>>, vector<32x32xbf16>
    %c0_12 = arith.constant 0 : index
    %c0_13 = arith.constant 0 : index
    %14 = vector.load %arg7[%c0_12, %c0_13] : memref<32x256xbf16, #tpu.memory_space<vmem>>, vector<32x256xbf16>
    %cst = arith.constant dense<0.000000e+00> : vector<32x256xf32>
    %15 = tpu.matmul %13, %14, %cst {dimension_numbers = #tpu.dot_dimension_numbers<[1], [0], [0], [1], [0, 0, 1, 1], [], []>} : vector<32x32xbf16>, vector<32x256xbf16>, vector<32x256xf32> -> vector<32x256xf32>
    %16 = vector.extract_strided_slice %15 {offsets = [0, 0], sizes = [32, 128], strides = [1, 1]} : vector<32x256xf32> to vector<32x128xf32>
    %17 = arith.mulf %16, %16 : vector<32x128xf32>
    %18 = vector.extract_strided_slice %15 {offsets = [0, 128], sizes = [32, 128], strides = [1, 1]} : vector<32x256xf32> to vector<32x128xf32>
    %19 = arith.addf %16, %18 : vector<32x128xf32>
    %20 = arith.mulf %18, %18 : vector<32x128xf32>
    %21 = arith.addf %17, %20 : vector<32x128xf32>
    %c0_14 = arith.constant 0 : index
    %c0_15 = arith.constant 0 : index
    %22 = vector.load %arg5[%c0_14, %c0_15] : memref<32x128xf32, #tpu.memory_space<vmem>>, vector<32x128xf32>
    %23 = arith.addf %22, %19 : vector<32x128xf32>
    %c0_16 = arith.constant 0 : index
    %c0_17 = arith.constant 0 : index
    %24 = vector.load %arg5[%c0_16, %c0_17] : memref<32x128xf32, #tpu.memory_space<vmem>>, vector<32x128xf32>
    tpu.vector_store %arg5[%c0_16, %c0_17], %23 {strides = array<i32>} : memref<32x128xf32, #tpu.memory_space<vmem>>, vector<32x128xf32>,
    %c0_18 = arith.constant 0 : index
    %c0_19 = arith.constant 0 : index
    %25 = vector.load %arg6[%c0_18, %c0_19] : memref<32x128xf32, #tpu.memory_space<vmem>>, vector<32x128xf32>
    %26 = arith.addf %25, %21 : vector<32x128xf32>
    %c0_20 = arith.constant 0 : index
    %c0_21 = arith.constant 0 : index
    %27 = vector.load %arg6[%c0_20, %c0_21] : memref<32x128xf32, #tpu.memory_space<vmem>>, vector<32x128xf32>
    tpu.vector_store %arg6[%c0_20, %c0_21], %26 {strides = array<i32>} : memref<32x128xf32, #tpu.memory_space<vmem>>, vector<32x128xf32>,
    return
  }
  func.func @transform_0(%arg0: i32, %arg1: i32) -> (i32, i32, i32) {
    %c0_i32 = arith.constant 0 : i32
    %c0_i32_0 = arith.constant 0 : i32
    return %arg0, %c0_i32, %arg1 : i32, i32, i32
  }
  func.func @transform_1(%arg0: i32, %arg1: i32) -> (i32, i32, i32) {
    %c0_i32 = arith.constant 0 : i32
    %c0_i32_0 = arith.constant 0 : i32
    return %arg0, %c0_i32, %arg1 : i32, i32, i32
  }
  func.func @transform_2(%arg0: i32, %arg1: i32) -> (i32, i32) {
    %c0_i32 = arith.constant 0 : i32
    %c0_i32_0 = arith.constant 0 : i32
    %c0_i32_1 = arith.constant 0 : i32
    return %c0_i32, %c0_i32_0 : i32, i32
  }
  func.func @transform_3(%arg0: i32, %arg1: i32) -> (i32, i32) {
    %c0_i32 = arith.constant 0 : i32
    %c0_i32_0 = arith.constant 0 : i32
    %c0_i32_1 = arith.constant 0 : i32
    return %c0_i32, %c0_i32_0 : i32, i32
  }
  func.func @transform_4(%arg0: i32, %arg1: i32) -> (i32, i32) {
    %c0_i32 = arith.constant 0 : i32
    %c0_i32_0 = arith.constant 0 : i32
    %c0_i32_1 = arith.constant 0 : i32
    return %c0_i32, %c0_i32_0 : i32, i32
  }
}

</mosaic_0001>

<llo_original>
// kernel: tpu_custom_call.1
$region0: #{tpu_custom_call.1}
  #allocation0 [shape = 'u32[]', space=smem, size = 0x4, offset = 0x4, fixed_abs, tag = 'smem constant byte address 0x4 - core index']
  #allocation1 [shape = 'u32[144,128]{1,0:T(1,128)}', space=vmem, size = 0x12000, scoped, tag = 'internal scratch']
  #allocation2 [shape = 'bf16[32,256]{1,0:T(16,128)(2,1)}', space=vmem, size = 0x4000, scoped, tag = 'scratch operand']
  %s0 = inlined_call_operand.hbm [shape: f32[2,16,256], index: 0, kind: input, shape index: {}]
  %s1 = inlined_call_operand.hbm [shape: f32[2,16,256], index: 1, kind: input, shape index: {}]
  %s2 = inlined_call_operand.hbm [shape: bf16[32,32], index: 2, kind: input, shape index: {}]
  %s3 = inlined_call_operand.hbm [shape: f32[32,128], index: 3, kind: output, shape index: {0}]
  %s4 = inlined_call_operand.hbm [shape: f32[32,128], index: 4, kind: output, shape index: {1}]
  %5 = xla_tuple %s3, %s4
  %s6 = sld [smem:[#allocation0]]
  $region69: #{tpu_custom_call.1} parent=0
    _
  %s8 = ssub.s32 1, %s6
  %s9 = scalar_select 0, %s8, %s6
  $region1: #{tpu_custom_call.1} parent=0
    #allocation3 [shape = 'u8[32768]{0}', space=vmem, size = 0x8000, scoped, tag = 'input window, operand 0']
    #allocation4 [shape = 's32[2]{0}', space=sflag, size = 0x8, scoped, tag = 'scoped memory for tpu_custom_call.1']
    #allocation5 [shape = 's32[2]{0}', space=sflag, size = 0x8, scoped, tag = 'scoped memory for tpu_custom_call.1']
    #allocation6 [shape = 'u8[32768]{0}', space=vmem, size = 0x8000, scoped, tag = 'input window, operand 1']
    #allocation7 [shape = 's32[2]{0}', space=sflag, size = 0x8, scoped, tag = 'scoped memory for tpu_custom_call.1']
    #allocation8 [shape = 'u8[8192]{0}', space=vmem, size = 0x2000, scoped, tag = 'input window, operand 2, single buffered']
    #allocation9 [shape = 'u8[16384]{0}', space=vmem, size = 0x4000, scoped, tag = 'output window, operand 0, single buffered']
    #allocation10 [shape = 'u8[16384]{0}', space=vmem, size = 0x4000, scoped, tag = 'output window, operand 1, single buffered']
    #allocation11 [shape = 's32[1]{0}', space=sflag, size = 0x4, scoped, tag = 'scoped memory for tpu_custom_call.1']
    %10 = vsyncpa [#allocation4], 0
    %s11 = scalar_lea.sflag [#allocation4], 1
    %12 = vsyncpa %s11, 0
    %13 = vsyncpa [#allocation7], 0
    %s14 = scalar_lea.sflag [#allocation7], 1
    %15 = vsyncpa %s14, 0
    %16 = vsyncpa [#allocation5], 0
    %17 = vsyncpa [#allocation11], 0
    loop: start=0, step=1, limit=4
    $region2: #{tpu_custom_call.1} parent=1 // loop_pre_header
      _
    $region3: #{tpu_custom_call.1} parent=1 // loop_header
      %s19 = sphi 0, %s23
      %p20 = scmp.ge.s32.totalorder %s19, 4
      %s26 = sphi 0, %s38
      %s27 = sphi 0, %s34
      %s28 = sphi 0, %s26
      %s29 = sphi 0, %s27
      %s30 = sphi 0, %s28
      %s31 = sphi 0, %s29
      %s43 = sphi 0, %s45
      %s46 = sphi 0, %s43
      %s47 = sphi 0, %s46
      %s63 = sphi 0, %s47
      %s71 = sphi 0, %s73
      %s74 = sphi 0, %s71
      %s75 = sphi 0, %s74
      %s91 = sphi 0, %s75
      %s95 = sphi 0, %s95
      %s97 = sphi 0, %s95
      %s98 = sphi 0, %s97
      %s112 = sphi 0, %s98
      %s116 = sphi 0, %s116
      %s118 = sphi 0, %s116
      %s119 = sphi 0, %s118
      %s133 = sphi 0, %s119
      %s137 = sphi 0, %s137
      %s139 = sphi 0, %s137
      %s140 = sphi 0, %s139
      %s154 = sphi 0, %s140
    $region4: #{tpu_custom_call.1} parent=1 // loop_header_branch
      %22 = sbr.rel (%p20) target = $region8
    $region5: #{tpu_custom_call.1} parent=1 // loop_body
      %s24 = ssub.s32 %s19, 1
      %s25 = ssub.s32 %s19, 2
      %s32 = sadd.s32 1, %s27
      %p33 = scmp.ge.s32.totalorder %s32, 1
      %s34 = scalar_select %p33, 0, %s32
      %s35 = sadd.s32 1, %s26
      %s36 = scalar_select %p33, %s35, %s26
      %p37 = scmp.ge.s32.totalorder %s36, 2
      %s38 = scalar_select %p37, 0, %s36
      %s39 = ssub.s32 %s26, %s38
      %s40 = ssub.s32 %s27, %s34
      %s41 = sor.u32 %s39, %s40
      %p42 = scmp.eq.s32.totalorder %s41, 0
      %s44 = sadd.s32 %s43, 1
      %s45 = scalar_select %p42, %s43, %s44
      %p48 = pneg %p42
      %p49 = scmp.eq.s32.totalorder %s19, 1
      %p50 = por %p48, %p49
      %p51 = scmp.ne.s32.totalorder %s43, %s46
      %p52 = scmp.eq.s32.totalorder %s19, 0
      %p53 = por %p51, %p52
      %p54 = scmp.ne.s32.totalorder %s43, %s46
      %p55 = scmp.eq.s32.totalorder %s24, 1
      %p56 = por %p54, %p55
      %p57 = scmp.ne.s32.totalorder %s46, %s47
      %p58 = scmp.eq.s32.totalorder %s24, 0
      %p59 = por %p57, %p58
      %p60 = scmp.ne.s32.totalorder %s46, %s47
      %p61 = scmp.eq.s32.totalorder %s25, 1
      %p62 = por %p60, %p61
      %p64 = scmp.ne.s32.totalorder %s47, %s63
      %p65 = scmp.eq.s32.totalorder %s25, 0
      %p66 = por %p64, %p65
      %s67 = ssub.s32 %s26, %s38
      %s68 = ssub.s32 %s27, %s34
      %s69 = sor.u32 %s67, %s68
      %p70 = scmp.eq.s32.totalorder %s69, 0
      %s72 = sadd.s32 %s71, 1
      %s73 = scalar_select %p70, %s71, %s72
      %p76 = pneg %p70
      %p77 = scmp.eq.s32.totalorder %s19, 1
      %p78 = por %p76, %p77
      %p79 = scmp.ne.s32.totalorder %s71, %s74
      %p80 = scmp.eq.s32.totalorder %s19, 0
      %p81 = por %p79, %p80
      %p82 = scmp.ne.s32.totalorder %s71, %s74
      %p83 = scmp.eq.s32.totalorder %s24, 1
      %p84 = por %p82, %p83
      %p85 = scmp.ne.s32.totalorder %s74, %s75
      %p86 = scmp.eq.s32.totalorder %s24, 0
      %p87 = por %p85, %p86
      %p88 = scmp.ne.s32.totalorder %s74, %s75
      %p89 = scmp.eq.s32.totalorder %s25, 1
      %p90 = por %p88, %p89
      %p92 = scmp.ne.s32.totalorder %s75, %s91
      %p93 = scmp.eq.s32.totalorder %s25, 0
      %p94 = por %p92, %p93
      %s96 = sadd.s32 %s95, 1
      %p99 = scmp.eq.s32.totalorder %s19, 1
      %p100 = scmp.ne.s32.totalorder %s95, %s97
      %p101 = scmp.eq.s32.totalorder %s19, 0
      %p102 = por %p100, %p101
      %p103 = scmp.ne.s32.totalorder %s95, %s97
      %p104 = scmp.eq.s32.totalorder %s24, 1
      %p105 = por %p103, %p104
      %p106 = scmp.ne.s32.totalorder %s97, %s98
      %p107 = scmp.eq.s32.totalorder %s24, 0
      %p108 = por %p106, %p107
      %p109 = scmp.ne.s32.totalorder %s97, %s98
      %p110 = scmp.eq.s32.totalorder %s25, 1
      %p111 = por %p109, %p110
      %p113 = scmp.ne.s32.totalorder %s98, %s112
      %p114 = scmp.eq.s32.totalorder %s25, 0
      %p115 = por %p113, %p114
      %s117 = sadd.s32 %s116, 1
      %p120 = scmp.eq.s32.totalorder %s19, 1
      %p121 = scmp.ne.s32.totalorder %s116, %s118
      %p122 = scmp.eq.s32.totalorder %s19, 0
      %p123 = por %p121, %p122
      %p124 = scmp.ne.s32.totalorder %s116, %s118
      %p125 = scmp.eq.s32.totalorder %s24, 1
      %p126 = por %p124, %p125
      %p127 = scmp.ne.s32.totalorder %s118, %s119
      %p128 = scmp.eq.s32.totalorder %s24, 0
      %p129 = por %p127, %p128
      %p130 = scmp.ne.s32.totalorder %s118, %s119
      %p131 = scmp.eq.s32.totalorder %s25, 1
      %p132 = por %p130, %p131
      %p134 = scmp.ne.s32.totalorder %s119, %s133
      %p135 = scmp.eq.s32.totalorder %s25, 0
      %p136 = por %p134, %p135
      %s138 = sadd.s32 %s137, 1
      %p141 = scmp.eq.s32.totalorder %s19, 1
      %p142 = scmp.ne.s32.totalorder %s137, %s139
      %p143 = scmp.eq.s32.totalorder %s19, 0
      %p144 = por %p142, %p143
      %p145 = scmp.ne.s32.totalorder %s137, %s139
      %p146 = scmp.eq.s32.totalorder %s24, 1
      %p147 = por %p145, %p146
      %p148 = scmp.ne.s32.totalorder %s139, %s140
      %p149 = scmp.eq.s32.totalorder %s24, 0
      %p150 = por %p148, %p149
      %p151 = scmp.ne.s32.totalorder %s139, %s140
      %p152 = scmp.eq.s32.totalorder %s25, 1
      %p153 = por %p151, %p152
      %p155 = scmp.ne.s32.totalorder %s140, %s154
      %p156 = scmp.eq.s32.totalorder %s25, 0
      %p157 = por %p155, %p156
      %p158 = scmp.le.s32.totalorder 1, %s19
      %p159 = scmp.lt.s32.totalorder %s19, 3
      %p160 = pnand %p158, %p159
      %p161 = pneg %p160
      // Predicated region
      $region9: #{tpu_custom_call.1} parent=5 // pred_check
        _
      $region10: #{tpu_custom_call.1} parent=5 // pred_check_branch
        %163 = sbr.rel (%p160) target = $region12
      $region11: #{tpu_custom_call.1} parent=5 // pred_region
        %s164 = ssub.s32 %s19, 1
        // Predicated region
        $region13: #{tpu_custom_call.1} parent=11 // pred_check
          %p165 = pneg %p108
        $region14: #{tpu_custom_call.1} parent=11 // pred_check_branch
          %167 = sbr.rel (%p165) target = $region16
        $region15: #{tpu_custom_call.1} parent=11 // pred_region
          %s169 = ssub.s32 256, 256
          %170 = vsyncadd [#allocation7], %s169
          %s171 = sshll.u32 [#allocation8], 4
          %s172 = int_to_ptr.vmem [resolvable:$true] %s171
          %177 = dma.hbm_to_vmem [thread:$0]  %s2, 256, %s172, [#allocation7], 64, 64, 4
        $region16: #{tpu_custom_call.1} parent=11 // pred_fallthru
          _
      $region12: #{tpu_custom_call.1} parent=5 // pred_fallthru
        _
      %p178 = scmp.lt.s32.totalorder %s19, 2
      // Predicated region
      $region17: #{tpu_custom_call.1} parent=5 // pred_check
        %p179 = pneg %p178
      $region18: #{tpu_custom_call.1} parent=5 // pred_check_branch
        %181 = sbr.rel (%p179) target = $region20
      $region19: #{tpu_custom_call.1} parent=5 // pred_region
        // Predicated region
        $region21: #{tpu_custom_call.1} parent=19 // pred_check
          %p182 = pneg %p53
        $region22: #{tpu_custom_call.1} parent=19 // pred_check_branch
          %184 = sbr.rel (%p182) target = $region24
        $region23: #{tpu_custom_call.1} parent=19 // pred_region
          %s185 = sand.u32 %s43, 1
          %s186 = scalar_lea.sflag [#allocation4], %s185
          %s187 = sand.u32 %s43, 1
          %s188 = smul.addr %s187, 32
          %s189 = scalar_lea.vmem [#allocation3], %s188
          %s190 = smul.u32 2, %s27
          %s192 = ssub.s32 512, 512
          %193 = vsyncadd %s186, %s192
          %s194 = smul.addr %s26, 4
          %s195 = sadd.s32 %s190, %s194
          %s196 = smul.addr %s195, 128
          %s197 = scalar_lea.hbm %s0, %s196
          %s198 = sshll.u32 %s189, 4
          %s199 = int_to_ptr.vmem [resolvable:$true] %s198
          %204 = dma.hbm_to_vmem [thread:$0]  %s197, 512, %s199, %s186, 256, 256, 16
        $region24: #{tpu_custom_call.1} parent=19 // pred_fallthru
          _
        // Predicated region
        $region25: #{tpu_custom_call.1} parent=19 // pred_check
          %p205 = pneg %p81
        $region26: #{tpu_custom_call.1} parent=19 // pred_check_branch
          %207 = sbr.rel (%p205) target = $region28
        $region27: #{tpu_custom_call.1} parent=19 // pred_region
          %s208 = sand.u32 %s19, 1
          %s209 = scalar_lea.sflag [#allocation7], %s208
          %s210 = sand.u32 %s71, 1
          %s211 = smul.addr %s210, 32
          %s212 = scalar_lea.vmem [#allocation6], %s211
          %s213 = smul.u32 2, %s27
          %s215 = ssub.s32 512, 512
          %216 = vsyncadd %s209, %s215
          %s217 = smul.addr %s26, 4
          %s218 = sadd.s32 %s213, %s217
          %s219 = smul.addr %s218, 128
          %s220 = scalar_lea.hbm %s1, %s219
          %s221 = sshll.u32 %s212, 4
          %s222 = int_to_ptr.vmem [resolvable:$true] %s221
          %227 = dma.hbm_to_vmem [thread:$0]  %s220, 512, %s222, %s209, 256, 256, 16
        $region28: #{tpu_custom_call.1} parent=19 // pred_fallthru
          _
      $region20: #{tpu_custom_call.1} parent=5 // pred_fallthru
        _
      %p228 = scmp.le.s32.totalorder 1, %s19
      %p229 = scmp.lt.s32.totalorder %s19, 3
      %p230 = pnand %p228, %p229
      %p231 = pneg %p230
      // Predicated region
      $region29: #{tpu_custom_call.1} parent=5 // pred_check
        _
      $region30: #{tpu_custom_call.1} parent=5 // pred_check_branch
        %233 = sbr.rel (%p230) target = $region32
      $region31: #{tpu_custom_call.1} parent=5 // pred_region
        %s234 = ssub.s32 %s19, 1
        %s235 = sand.u32 %s46, 1
        %s236 = scalar_lea.sflag [#allocation4], %s235
        %s237 = sand.u32 %s46, 1
        %s238 = smul.addr %s237, 32
        %s239 = scalar_lea.vmem [#allocation3], %s238
        // Predicated region
        $region33: #{tpu_custom_call.1} parent=31 // pred_check
          %p240 = pneg %p59
        $region34: #{tpu_custom_call.1} parent=31 // pred_check_branch
          %242 = sbr.rel (%p240) target = $region36
        $region35: #{tpu_custom_call.1} parent=31 // pred_region
          %243 = dma.done %s236, 512
        $region36: #{tpu_custom_call.1} parent=31 // pred_fallthru
          _
        %s244 = sand.u32 %s24, 1
        %s245 = scalar_lea.sflag [#allocation7], %s244
        %s246 = sand.u32 %s74, 1
        %s247 = smul.addr %s246, 32
        %s248 = scalar_lea.vmem [#allocation6], %s247
        // Predicated region
        $region37: #{tpu_custom_call.1} parent=31 // pred_check
          %p249 = pneg %p87
        $region38: #{tpu_custom_call.1} parent=31 // pred_check_branch
          %251 = sbr.rel (%p249) target = $region40
        $region39: #{tpu_custom_call.1} parent=31 // pred_region
          %252 = dma.done %s245, 512
        $region40: #{tpu_custom_call.1} parent=31 // pred_fallthru
          _
        // Predicated region
        $region41: #{tpu_custom_call.1} parent=31 // pred_check
          %p253 = pneg %p108
        $region42: #{tpu_custom_call.1} parent=31 // pred_check_branch
          %255 = sbr.rel (%p253) target = $region44
        $region43: #{tpu_custom_call.1} parent=31 // pred_region
          %256 = dma.done [#allocation7], 256
        $region44: #{tpu_custom_call.1} parent=31 // pred_fallthru
          _
        %s257 = sand.u32 %s46, 1
        %s258 = scalar_lea.sflag [#allocation4], %s257
        %s259 = sand.u32 %s46, 1
        %s260 = smul.addr %s259, 32
        %s261 = scalar_lea.vmem [#allocation3], %s260
        %p262 = pneg %p59
        %p263 = pneg %p56
        %s264 = sand.u32 %s24, 1
        %s265 = scalar_lea.sflag [#allocation7], %s264
        %s266 = sand.u32 %s74, 1
        %s267 = smul.addr %s266, 32
        %s268 = scalar_lea.vmem [#allocation6], %s267
        %p269 = pneg %p87
        %p270 = pneg %p84
        %p271 = pneg %p108
        %p272 = pneg %p105
        %p273 = pneg %p129
        %p274 = pneg %p126
        %p275 = pneg %p150
        %p276 = pneg %p147
        %s277 = smul.u32 2, %s29
        %s278 = smul.u32 2, %s29
        %p280 = scmp.eq.s32.totalorder %s28, 0
        %p281 = scmp.eq.s32.totalorder %s29, 0
        %p282 = pnand %p280, %p281
        %p283 = pneg %p282
        // Predicated region
        $region45: #{tpu_custom_call.1} parent=31 // pred_check
          _
        $region46: #{tpu_custom_call.1} parent=31 // pred_check_branch
          %285 = sbr.rel (%p282) target = $region48
        $region47: #{tpu_custom_call.1} parent=31 // pred_region
          %286 = vst [vmem:[#allocation9] sm:$0xff] 0.0
          %287 = vst [vmem:[#allocation9 + $0x8] sm:$0xff] 0.0
          %288 = vst [vmem:[#allocation9 + $0x10] sm:$0xff] 0.0
          %289 = vst [vmem:[#allocation9 + $0x18] sm:$0xff] 0.0
          %290 = vst [vmem:[#allocation10] sm:$0xff] 0.0
          %291 = vst [vmem:[#allocation10 + $0x8] sm:$0xff] 0.0
          %292 = vst [vmem:[#allocation10 + $0x10] sm:$0xff] 0.0
          %293 = vst [vmem:[#allocation10 + $0x18] sm:$0xff] 0.0
        $region48: #{tpu_custom_call.1} parent=31 // pred_fallthru
          _
        %v294 = vld [vmem:[%s239] sm:$0xff]
        %v295 = vld [vmem:[%s239 + $0x8] sm:$0xff]
        %v296 = vld [vmem:[%s239 + $0x10] sm:$0xff]
        %v297 = vld [vmem:[%s239 + $0x18] sm:$0xff]
        %v298 = vpack.c.bf16 %v296, %v294
        %v299 = vpack.c.bf16 %v297, %v295
        %300 = vst [vmem:[#allocation2] sm:$0xff] %v298
        %301 = vst [vmem:[#allocation2 + $0x8] sm:$0xff] %v299
        %v302 = vld [vmem:[%s248] sm:$0xff]
        %v303 = vld [vmem:[%s248 + $0x8] sm:$0xff]
        %v304 = vld [vmem:[%s248 + $0x10] sm:$0xff]
        %v305 = vld [vmem:[%s248 + $0x18] sm:$0xff]
        %v306 = vpack.c.bf16 %v304, %v302
        %v307 = vpack.c.bf16 %v305, %v303
        %308 = vst [vmem:[#allocation2 + $0x10] sm:$0xff] %v306
        %309 = vst [vmem:[#allocation2 + $0x18] sm:$0xff] %v307
        %v310 = vld [vmem:[#allocation8] sm:$0xf]
        %v311 = vld [vmem:[#allocation8 + $0x4] sm:$0xf]
        %v312 = vld [vmem:[#allocation8 + $0x8] sm:$0xf]
        %v313 = vld [vmem:[#allocation8 + $0xc] sm:$0xf]
        %v314 = vld [vmem:[#allocation2] sm:$0xff]
        %v315 = vld [vmem:[#allocation2 + $0x8] sm:$0xff]
        %v316 = vld [vmem:[#allocation2 + $0x10] sm:$0xff]
        %v317 = vld [vmem:[#allocation2 + $0x18] sm:$0xff]
        %v322 = vunpack.c.l.b16 %v310
        %v323 = vunpack.c.l.b16 %v311
        %v324 = vunpack.c.l.b16 %v312
        %v325 = vunpack.c.l.b16 %v313
        %v326 = vpack.c.b16 %v323, %v322
        %v327 = vpack.c.b16 %v325, %v324
        %vm328 = vcmask 261120
        %v330 = vsel %vm328, %v326, 0
        %v333 = vsel %vm328, %v327, 0
        %335 = vmatprep.subr.bf16.mxu0 %v315
        %336 = vmatpush1.bf16.msra.mxu0 %v314
        %337 = vmatprep.subr.bf16.mxu0 %v317
        %338 = vmatpush1.bf16.msra.mxu0 %v316
        %339 = vmatprep.subr.bf16.mxu0 0
        %340 = vmatpush1.bf16.msra.mxu0 0
        %341 = vmatprep.subr.bf16.mxu0 0
        %342 = vmatpush1.bf16.msra.mxu0 0
        %343 = vmatprep.subr.bf16.mxu0 0
        %344 = vmatpush1.bf16.msra.mxu0 0
        %345 = vmatprep.subr.bf16.mxu0 0
        %346 = vmatpush1.bf16.msra.mxu0 0
        %347 = vmatprep.subr.bf16.mxu0 0
        %348 = vmatpush1.bf16.msra.mxu0 0
        %349 = vmatprep.subr.bf16.mxu0 0
        %350 = vmatpush1.bf16.msra.mxu0 0
        %351 = vmatprep.subr.bf16.mxu0 0
        %352 = vmatpush1.bf16.msra.mxu0 0
        %353 = vmatprep.subr.bf16.mxu0 0
        %354 = vmatpush1.bf16.msra.mxu0 0
        %355 = vmatprep.subr.bf16.mxu0 0
        %356 = vmatpush1.bf16.msra.mxu0 0
        %357 = vmatprep.subr.bf16.mxu0 0
        %358 = vmatpush1.bf16.msra.mxu0 0
        %359 = vmatprep.subr.bf16.mxu0 0
        %360 = vmatpush1.bf16.msra.mxu0 0
        %361 = vmatprep.subr.bf16.mxu0 0
        %362 = vmatpush1.bf16.msra.mxu0 0
        %363 = vmatprep.subr.bf16.mxu0 0
        %364 = vmatpush1.bf16.msra.mxu0 0
        %365 = vmatprep.subr.bf16.mxu0 0
        %366 = vmatpush1.bf16.msra.mxu0 0
        %367 = vmatprep.mubr.bf16.mxu0 0
        %368 = vmatmul.mubr.bf16.gmra.mrb[0].mxu0 %v330
        %v369 = vpop.f32.mrb[0].mxu0
        %v370 = vadd.f32 0.0, %v369
        %v371 = vpop.f32.mrb[0].mxu0
        %v372 = vadd.f32 0.0, %v371
        %v373 = vpop.f32.mrb[0].mxu0
        %v374 = vadd.f32 0.0, %v373
        %v375 = vpop.f32.mrb[0].mxu0
        %v376 = vadd.f32 0.0, %v375
        %377 = vmatprep.mubr.bf16.mxu0 0
        %378 = vmatmul.mubr.bf16.gmra.mrb[0].mxu0 %v333
        %v379 = vpop.f32.mrb[0].mxu0
        %v380 = vadd.f32 0.0, %v379
        %v381 = vpop.f32.mrb[0].mxu0
        %v382 = vadd.f32 0.0, %v381
        %v383 = vpop.f32.mrb[0].mxu0
        %v384 = vadd.f32 0.0, %v383
        %v385 = vpop.f32.mrb[0].mxu0
        %v386 = vadd.f32 0.0, %v385
        %387 = vdwg.mxu0
        %v388 = vmul.f32 %v370, %v370
        %v389 = vmul.f32 %v374, %v374
        %v390 = vmul.f32 %v380, %v380
        %v391 = vmul.f32 %v384, %v384
        %v392 = vadd.f32 %v370, %v372
        %v393 = vadd.f32 %v374, %v376
        %v394 = vadd.f32 %v380, %v382
        %v395 = vadd.f32 %v384, %v386
        %v396 = vmul.f32 %v372, %v372
        %v397 = vmul.f32 %v376, %v376
        %v398 = vmul.f32 %v382, %v382
        %v399 = vmul.f32 %v386, %v386
        %v400 = vadd.f32 %v388, %v396
        %v401 = vadd.f32 %v389, %v397
        %v402 = vadd.f32 %v390, %v398
        %v403 = vadd.f32 %v391, %v399
        %v404 = vld [vmem:[#allocation9] sm:$0xff]
        %v405 = vld [vmem:[#allocation9 + $0x8] sm:$0xff]
        %v406 = vld [vmem:[#allocation9 + $0x10] sm:$0xff]
        %v407 = vld [vmem:[#allocation9 + $0x18] sm:$0xff]
        %v408 = vadd.f32 %v404, %v392
        %v409 = vadd.f32 %v405, %v393
        %v410 = vadd.f32 %v406, %v394
        %v411 = vadd.f32 %v407, %v395
        %412 = vst [vmem:[#allocation9] sm:$0xff] %v408
        %413 = vst [vmem:[#allocation9 + $0x8] sm:$0xff] %v409
        %414 = vst [vmem:[#allocation9 + $0x10] sm:$0xff] %v410
        %415 = vst [vmem:[#allocation9 + $0x18] sm:$0xff] %v411
        %v416 = vld [vmem:[#allocation10] sm:$0xff]
        %v417 = vld [vmem:[#allocation10 + $0x8] sm:$0xff]
        %v418 = vld [vmem:[#allocation10 + $0x10] sm:$0xff]
        %v419 = vld [vmem:[#allocation10 + $0x18] sm:$0xff]
        %v420 = vadd.f32 %v416, %v400
        %v421 = vadd.f32 %v417, %v401
        %v422 = vadd.f32 %v418, %v402
        %v423 = vadd.f32 %v419, %v403
        %424 = vst [vmem:[#allocation10] sm:$0xff] %v420
        %425 = vst [vmem:[#allocation10 + $0x8] sm:$0xff] %v421
        %426 = vst [vmem:[#allocation10 + $0x10] sm:$0xff] %v422
        %427 = vst [vmem:[#allocation10 + $0x18] sm:$0xff] %v423
        // Predicated region
        $region49: #{tpu_custom_call.1} parent=31 // pred_check
          %p428 = pneg %p126
        $region50: #{tpu_custom_call.1} parent=31 // pred_check_branch
          %430 = sbr.rel (%p428) target = $region52
        $region51: #{tpu_custom_call.1} parent=31 // pred_region
          %s432 = ssub.s32 512, 512
          %433 = vsyncadd [#allocation5], %s432
          %s434 = sshll.u32 [#allocation9], 4
          %s435 = int_to_ptr.vmem [resolvable:$true] %s434
          %440 = dma.vmem_to_hbm [thread:$0]  %s435, 512, %s3, [#allocation5], 128, 128, 8
        $region52: #{tpu_custom_call.1} parent=31 // pred_fallthru
          _
        // Predicated region
        $region53: #{tpu_custom_call.1} parent=31 // pred_check
          %p441 = pneg %p147
        $region54: #{tpu_custom_call.1} parent=31 // pred_check_branch
          %443 = sbr.rel (%p441) target = $region56
        $region55: #{tpu_custom_call.1} parent=31 // pred_region
          %s445 = ssub.s32 512, 512
          %446 = vsyncadd [#allocation11], %s445
          %s447 = sshll.u32 [#allocation10], 4
          %s448 = int_to_ptr.vmem [resolvable:$true] %s447
          %453 = dma.vmem_to_hbm [thread:$0]  %s448, 512, %s4, [#allocation11], 128, 128, 8
        $region56: #{tpu_custom_call.1} parent=31 // pred_fallthru
          _
        // Predicated region
        $region57: #{tpu_custom_call.1} parent=31 // pred_check
          %p454 = pneg %p126
        $region58: #{tpu_custom_call.1} parent=31 // pred_check_branch
          %456 = sbr.rel (%p454) target = $region60
        $region59: #{tpu_custom_call.1} parent=31 // pred_region
          %457 = dma.done [#allocation5], 512
        $region60: #{tpu_custom_call.1} parent=31 // pred_fallthru
          _
        // Predicated region
        $region61: #{tpu_custom_call.1} parent=31 // pred_check
          %p458 = pneg %p147
        $region62: #{tpu_custom_call.1} parent=31 // pred_check_branch
          %460 = sbr.rel (%p458) target = $region64
        $region63: #{tpu_custom_call.1} parent=31 // pred_region
          %461 = dma.done [#allocation11], 512
        $region64: #{tpu_custom_call.1} parent=31 // pred_fallthru
          _
      $region32: #{tpu_custom_call.1} parent=5 // pred_fallthru
        _
      %p462 = scmp.le.s32.totalorder 2, %s19
      // Predicated region
      $region65: #{tpu_custom_call.1} parent=5 // pred_check
        %p463 = pneg %p462
      $region66: #{tpu_custom_call.1} parent=5 // pred_check_branch
        %465 = sbr.rel (%p463) target = $region68
      $region67: #{tpu_custom_call.1} parent=5 // pred_region
        %s466 = ssub.s32 %s19, 2
      $region68: #{tpu_custom_call.1} parent=5 // pred_fallthru
        _
    $region6: #{tpu_custom_call.1} parent=1 // loop_footer
      %s23 = sadd.s32 1, %s19
    $region7: #{tpu_custom_call.1} parent=1 // loop_footer_branch
      %18 = sbr.rel target = $region3
    $region8: #{tpu_custom_call.1} parent=1 // loop_exit
      _
    %467 = vsyncpa [#allocation4], 1
    %s468 = scalar_lea.sflag [#allocation4], 1
    %469 = vsyncpa %s468, 1
    %470 = vsyncpa [#allocation7], 1
    %s471 = scalar_lea.sflag [#allocation7], 1
    %472 = vsyncpa %s471, 1
    %473 = vsyncpa [#allocation5], 1
    %s474 = scalar_lea.sflag [#allocation5], 1
    %475 = vsyncpa %s474, 1
    %476 = vsyncpa [#allocation11], 1

// kernel: tpu_custom_call.1
$region0: #{tpu_custom_call.1}
  #allocation0 [shape = 'u32[]', space=smem, size = 0x4, offset = 0x4, fixed_abs, tag = 'smem constant byte address 0x4 - core index']
  #allocation1 [shape = 'u32[144,128]{1,0:T(1,128)}', space=vmem, size = 0x12000, scoped, tag = 'internal scratch']
  #allocation2 [shape = 'bf16[32,256]{1,0:T(16,128)(2,1)}', space=vmem, size = 0x4000, scoped, tag = 'scratch operand']
  %s0 = inlined_call_operand.hbm [shape: f32[2,16,256], index: 0, kind: input, shape index: {}]
  %s1 = inlined_call_operand.hbm [shape: f32[2,16,256], index: 1, kind: input, shape index: {}]
  %s2 = inlined_call_operand.hbm [shape: bf16[32,32], index: 2, kind: input, shape index: {}]
  %s3 = inlined_call_operand.hbm [shape: f32[32,128], index: 3, kind: output, shape index: {0}]
  %s4 = inlined_call_operand.hbm [shape: f32[32,128], index: 4, kind: output, shape index: {1}]
  %5 = xla_tuple %s3, %s4
  %s6 = sld [smem:[#allocation0]]
  $region69: #{tpu_custom_call.1} parent=0
    _
  %s8 = ssub.s32 1, %s6
  %s9 = scalar_select 0, %s8, %s6
  $region1: #{tpu_custom_call.1} parent=0
    #allocation3 [shape = 'u8[32768]{0}', space=vmem, size = 0x8000, scoped, tag = 'input window, operand 0']
    #allocation4 [shape = 's32[2]{0}', space=sflag, size = 0x8, scoped, tag = 'scoped memory for tpu_custom_call.1']
    #allocation5 [shape = 's32[2]{0}', space=sflag, size = 0x8, scoped, tag = 'scoped memory for tpu_custom_call.1']
    #allocation6 [shape = 'u8[32768]{0}', space=vmem, size = 0x8000, scoped, tag = 'input window, operand 1']
    #allocation7 [shape = 's32[2]{0}', space=sflag, size = 0x8, scoped, tag = 'scoped memory for tpu_custom_call.1']
    #allocation8 [shape = 'u8[8192]{0}', space=vmem, size = 0x2000, scoped, tag = 'input window, operand 2, single buffered']
    #allocation9 [shape = 'u8[16384]{0}', space=vmem, size = 0x4000, scoped, tag = 'output window, operand 0, single buffered']
    #allocation10 [shape = 'u8[16384]{0}', space=vmem, size = 0x4000, scoped, tag = 'output window, operand 1, single buffered']
    #allocation11 [shape = 's32[1]{0}', space=sflag, size = 0x4, scoped, tag = 'scoped memory for tpu_custom_call.1']
    %10 = vsyncpa [#allocation4], 0
    %s11 = scalar_lea.sflag [#allocation4], 1
    %12 = vsyncpa %s11, 0
    %13 = vsyncpa [#allocation7], 0
    %s14 = scalar_lea.sflag [#allocation7], 1
    %15 = vsyncpa %s14, 0
    %16 = vsyncpa [#allocation5], 0
    %17 = vsyncpa [#allocation11], 0
    loop: start=0, step=1, limit=4
    $region2: #{tpu_custom_call.1} parent=1 // loop_pre_header
      _
    $region3: #{tpu_custom_call.1} parent=1 // loop_header
      %s19 = sphi 0, %s23
      %p20 = scmp.ge.s32.totalorder %s19, 4
      %s26 = sphi 0, %s38
      %s27 = sphi 0, %s34
      %s28 = sphi 0, %s26
      %s29 = sphi 0, %s27
      %s30 = sphi 0, %s28
      %s31 = sphi 0, %s29
      %s43 = sphi 0, %s45
      %s46 = sphi 0, %s43
      %s47 = sphi 0, %s46
      %s63 = sphi 0, %s47
      %s71 = sphi 0, %s73
      %s74 = sphi 0, %s71
      %s75 = sphi 0, %s74
      %s91 = sphi 0, %s75
      %s95 = sphi 0, %s95
      %s97 = sphi 0, %s95
      %s98 = sphi 0, %s97
      %s112 = sphi 0, %s98
      %s116 = sphi 0, %s116
      %s118 = sphi 0, %s116
      %s119 = sphi 0, %s118
      %s133 = sphi 0, %s119
      %s137 = sphi 0, %s137
      %s139 = sphi 0, %s137
      %s140 = sphi 0, %s139
      %s154 = sphi 0, %s140
    $region4: #{tpu_custom_call.1} parent=1 // loop_header_branch
      %22 = sbr.rel (%p20) target = $region8
    $region5: #{tpu_custom_call.1} parent=1 // loop_body
      %s24 = ssub.s32 %s19, 1
      %s25 = ssub.s32 %s19, 2
      %s32 = sadd.s32 1, %s27
      %p33 = scmp.ge.s32.totalorder %s32, 1
      %s34 = scalar_select %p33, 0, %s32
      %s35 = sadd.s32 1, %s26
      %s36 = scalar_select %p33, %s35, %s26
      %p37 = scmp.ge.s32.totalorder %s36, 2
      %s38 = scalar_select %p37, 0, %s36
      %s39 = ssub.s32 %s26, %s38
      %s40 = ssub.s32 %s27, %s34
      %s41 = sor.u32 %s39, %s40
      %p42 = scmp.eq.s32.totalorder %s41, 0
      %s44 = sadd.s32 %s43, 1
      %s45 = scalar_select %p42, %s43, %s44
      %p48 = pneg %p42
      %p49 = scmp.eq.s32.totalorder %s19, 1
      %p50 = por %p48, %p49
      %p51 = scmp.ne.s32.totalorder %s43, %s46
      %p52 = scmp.eq.s32.totalorder %s19, 0
      %p53 = por %p51, %p52
      %p54 = scmp.ne.s32.totalorder %s43, %s46
      %p55 = scmp.eq.s32.totalorder %s24, 1
      %p56 = por %p54, %p55
      %p57 = scmp.ne.s32.totalorder %s46, %s47
      %p58 = scmp.eq.s32.totalorder %s24, 0
      %p59 = por %p57, %p58
      %p60 = scmp.ne.s32.totalorder %s46, %s47
      %p61 = scmp.eq.s32.totalorder %s25, 1
      %p62 = por %p60, %p61
      %p64 = scmp.ne.s32.totalorder %s47, %s63
      %p65 = scmp.eq.s32.totalorder %s25, 0
      %p66 = por %p64, %p65
      %s67 = ssub.s32 %s26, %s38
      %s68 = ssub.s32 %s27, %s34
      %s69 = sor.u32 %s67, %s68
      %p70 = scmp.eq.s32.totalorder %s69, 0
      %s72 = sadd.s32 %s71, 1
      %s73 = scalar_select %p70, %s71, %s72
      %p76 = pneg %p70
      %p77 = scmp.eq.s32.totalorder %s19, 1
      %p78 = por %p76, %p77
      %p79 = scmp.ne.s32.totalorder %s71, %s74
      %p80 = scmp.eq.s32.totalorder %s19, 0
      %p81 = por %p79, %p80
      %p82 = scmp.ne.s32.totalorder %s71, %s74
      %p83 = scmp.eq.s32.totalorder %s24, 1
      %p84 = por %p82, %p83
      %p85 = scmp.ne.s32.totalorder %s74, %s75
      %p86 = scmp.eq.s32.totalorder %s24, 0
      %p87 = por %p85, %p86
      %p88 = scmp.ne.s32.totalorder %s74, %s75
      %p89 = scmp.eq.s32.totalorder %s25, 1
      %p90 = por %p88, %p89
      %p92 = scmp.ne.s32.totalorder %s75, %s91
      %p93 = scmp.eq.s32.totalorder %s25, 0
      %p94 = por %p92, %p93
      %s96 = sadd.s32 %s95, 1
      %p99 = scmp.eq.s32.totalorder %s19, 1
      %p100 = scmp.ne.s32.totalorder %s95, %s97
      %p101 = scmp.eq.s32.totalorder %s19, 0
      %p102 = por %p100, %p101
      %p103 = scmp.ne.s32.totalorder %s95, %s97
      %p104 = scmp.eq.s32.totalorder %s24, 1
      %p105 = por %p103, %p104
      %p106 = scmp.ne.s32.totalorder %s97, %s98
      %p107 = scmp.eq.s32.totalorder %s24, 0
      %p108 = por %p106, %p107
      %p109 = scmp.ne.s32.totalorder %s97, %s98
      %p110 = scmp.eq.s32.totalorder %s25, 1
      %p111 = por %p109, %p110
      %p113 = scmp.ne.s32.totalorder %s98, %s112
      %p114 = scmp.eq.s32.totalorder %s25, 0
      %p115 = por %p113, %p114
      %s117 = sadd.s32 %s116, 1
      %p120 = scmp.eq.s32.totalorder %s19, 1
      %p121 = scmp.ne.s32.totalorder %s116, %s118
      %p122 = scmp.eq.s32.totalorder %s19, 0
      %p123 = por %p121, %p122
      %p124 = scmp.ne.s32.totalorder %s116, %s118
      %p125 = scmp.eq.s32.totalorder %s24, 1
      %p126 = por %p124, %p125
      %p127 = scmp.ne.s32.totalorder %s118, %s119
      %p128 = scmp.eq.s32.totalorder %s24, 0
      %p129 = por %p127, %p128
      %p130 = scmp.ne.s32.totalorder %s118, %s119
      %p131 = scmp.eq.s32.totalorder %s25, 1
      %p132 = por %p130, %p131
      %p134 = scmp.ne.s32.totalorder %s119, %s133
      %p135 = scmp.eq.s32.totalorder %s25, 0
      %p136 = por %p134, %p135
      %s138 = sadd.s32 %s137, 1
      %p141 = scmp.eq.s32.totalorder %s19, 1
      %p142 = scmp.ne.s32.totalorder %s137, %s139
      %p143 = scmp.eq.s32.totalorder %s19, 0
      %p144 = por %p142, %p143
      %p145 = scmp.ne.s32.totalorder %s137, %s139
      %p146 = scmp.eq.s32.totalorder %s24, 1
      %p147 = por %p145, %p146
      %p148 = scmp.ne.s32.totalorder %s139, %s140
      %p149 = scmp.eq.s32.totalorder %s24, 0
      %p150 = por %p148, %p149
      %p151 = scmp.ne.s32.totalorder %s139, %s140
      %p152 = scmp.eq.s32.totalorder %s25, 1
      %p153 = por %p151, %p152
      %p155 = scmp.ne.s32.totalorder %s140, %s154
      %p156 = scmp.eq.s32.totalorder %s25, 0
      %p157 = por %p155, %p156
      %p158 = scmp.le.s32.totalorder 1, %s19
      %p159 = scmp.lt.s32.totalorder %s19, 3
      %p160 = pnand %p158, %p159
      %p161 = pneg %p160
      // Predicated region
      $region9: #{tpu_custom_call.1} parent=5 // pred_check
        _
      $region10: #{tpu_custom_call.1} parent=5 // pred_check_branch
        %163 = sbr.rel (%p160) target = $region12
      $region11: #{tpu_custom_call.1} parent=5 // pred_region
        %s164 = ssub.s32 %s19, 1
        // Predicated region
        $region13: #{tpu_custom_call.1} parent=11 // pred_check
          %p165 = pneg %p108
        $region14: #{tpu_custom_call.1} parent=11 // pred_check_branch
          %167 = sbr.rel (%p165) target = $region16
        $region15: #{tpu_custom_call.1} parent=11 // pred_region
          %s169 = ssub.s32 256, 256
          %170 = vsyncadd [#allocation7], %s169
          %s171 = sshll.u32 [#allocation8], 4
          %s172 = int_to_ptr.vmem [resolvable:$true] %s171
          %177 = dma.hbm_to_vmem [thread:$0]  %s2, 256, %s172, [#allocation7], 64, 64, 4
        $region16: #{tpu_custom_call.1} parent=11 // pred_fallthru
          _
      $region12: #{tpu_custom_call.1} parent=5 // pred_fallthru
        _
      %p178 = scmp.lt.s32.totalorder %s19, 2
      // Predicated region
      $region17: #{tpu_custom_call.1} parent=5 // pred_check
        %p179 = pneg %p178
      $region18: #{tpu_custom_call.1} parent=5 // pred_check_branch
        %181 = sbr.rel (%p179) target = $region20
      $region19: #{tpu_custom_call.1} parent=5 // pred_region
        // Predicated region
        $region21: #{tpu_custom_call.1} parent=19 // pred_check
          %p182 = pneg %p53
        $region22: #{tpu_custom_call.1} parent=19 // pred_check_branch
          %184 = sbr.rel (%p182) target = $region24
        $region23: #{tpu_custom_call.1} parent=19 // pred_region
          %s185 = sand.u32 %s43, 1
          %s186 = scalar_lea.sflag [#allocation4], %s185
          %s187 = sand.u32 %s43, 1
          %s188 = smul.addr %s187, 32
          %s189 = scalar_lea.vmem [#allocation3], %s188
          %s190 = smul.u32 2, %s27
          %s192 = ssub.s32 512, 512
          %193 = vsyncadd %s186, %s192
          %s194 = smul.addr %s26, 4
          %s195 = sadd.s32 %s190, %s194
          %s196 = smul.addr %s195, 128
          %s197 = scalar_lea.hbm %s0, %s196
          %s198 = sshll.u32 %s189, 4
          %s199 = int_to_ptr.vmem [resolvable:$true] %s198
          %204 = dma.hbm_to_vmem [thread:$0]  %s197, 512, %s199, %s186, 256, 256, 16
        $region24: #{tpu_custom_call.1} parent=19 // pred_fallthru
          _
        // Predicated region
        $region25: #{tpu_custom_call.1} parent=19 // pred_check
          %p205 = pneg %p81
        $region26: #{tpu_custom_call.1} parent=19 // pred_check_branch
          %207 = sbr.rel (%p205) target = $region28
        $region27: #{tpu_custom_call.1} parent=19 // pred_region
          %s208 = sand.u32 %s19, 1
          %s209 = scalar_lea.sflag [#allocation7], %s208
          %s210 = sand.u32 %s71, 1
          %s211 = smul.addr %s210, 32
          %s212 = scalar_lea.vmem [#allocation6], %s211
          %s213 = smul.u32 2, %s27
          %s215 = ssub.s32 512, 512
          %216 = vsyncadd %s209, %s215
          %s217 = smul.addr %s26, 4
          %s218 = sadd.s32 %s213, %s217
          %s219 = smul.addr %s218, 128
          %s220 = scalar_lea.hbm %s1, %s219
          %s221 = sshll.u32 %s212, 4
          %s222 = int_to_ptr.vmem [resolvable:$true] %s221
          %227 = dma.hbm_to_vmem [thread:$0]  %s220, 512, %s222, %s209, 256, 256, 16
        $region28: #{tpu_custom_call.1} parent=19 // pred_fallthru
          _
      $region20: #{tpu_custom_call.1} parent=5 // pred_fallthru
        _
      %p228 = scmp.le.s32.totalorder 1, %s19
      %p229 = scmp.lt.s32.totalorder %s19, 3
      %p230 = pnand %p228, %p229
      %p231 = pneg %p230
      // Predicated region
      $region29: #{tpu_custom_call.1} parent=5 // pred_check
        _
      $region30: #{tpu_custom_call.1} parent=5 // pred_check_branch
        %233 = sbr.rel (%p230) target = $region32
      $region31: #{tpu_custom_call.1} parent=5 // pred_region
        %s234 = ssub.s32 %s19, 1
        %s235 = sand.u32 %s46, 1
        %s236 = scalar_lea.sflag [#allocation4], %s235
        %s237 = sand.u32 %s46, 1
        %s238 = smul.addr %s237, 32
        %s239 = scalar_lea.vmem [#allocation3], %s238
        // Predicated region
        $region33: #{tpu_custom_call.1} parent=31 // pred_check
          %p240 = pneg %p59
        $region34: #{tpu_custom_call.1} parent=31 // pred_check_branch
          %242 = sbr.rel (%p240) target = $region36
        $region35: #{tpu_custom_call.1} parent=31 // pred_region
          %243 = dma.done %s236, 512
        $region36: #{tpu_custom_call.1} parent=31 // pred_fallthru
          _
        %s244 = sand.u32 %s24, 1
        %s245 = scalar_lea.sflag [#allocation7], %s244
        %s246 = sand.u32 %s74, 1
        %s247 = smul.addr %s246, 32
        %s248 = scalar_lea.vmem [#allocation6], %s247
        // Predicated region
        $region37: #{tpu_custom_call.1} parent=31 // pred_check
          %p249 = pneg %p87
        $region38: #{tpu_custom_call.1} parent=31 // pred_check_branch
          %251 = sbr.rel (%p249) target = $region40
        $region39: #{tpu_custom_call.1} parent=31 // pred_region
          %252 = dma.done %s245, 512
        $region40: #{tpu_custom_call.1} parent=31 // pred_fallthru
          _
        // Predicated region
        $region41: #{tpu_custom_call.1} parent=31 // pred_check
          %p253 = pneg %p108
        $region42: #{tpu_custom_call.1} parent=31 // pred_check_branch
          %255 = sbr.rel (%p253) target = $region44
        $region43: #{tpu_custom_call.1} parent=31 // pred_region
          %256 = dma.done [#allocation7], 256
        $region44: #{tpu_custom_call.1} parent=31 // pred_fallthru
          _
        %s257 = sand.u32 %s46, 1
        %s258 = scalar_lea.sflag [#allocation4], %s257
        %s259 = sand.u32 %s46, 1
        %s260 = smul.addr %s259, 32
        %s261 = scalar_lea.vmem [#allocation3], %s260
        %p262 = pneg %p59
        %p263 = pneg %p56
        %s264 = sand.u32 %s24, 1
        %s265 = scalar_lea.sflag [#allocation7], %s264
        %s266 = sand.u32 %s74, 1
        %s267 = smul.addr %s266, 32
        %s268 = scalar_lea.vmem [#allocation6], %s267
        %p269 = pneg %p87
        %p270 = pneg %p84
        %p271 = pneg %p108
        %p272 = pneg %p105
        %p273 = pneg %p129
        %p274 = pneg %p126
        %p275 = pneg %p150
        %p276 = pneg %p147
        %s277 = smul.u32 2, %s29
        %s278 = smul.u32 2, %s29
        %p280 = scmp.eq.s32.totalorder %s28, 0
        %p281 = scmp.eq.s32.totalorder %s29, 0
        %p282 = pnand %p280, %p281
        %p283 = pneg %p282
        // Predicated region
        $region45: #{tpu_custom_call.1} parent=31 // pred_check
          _
        $region46: #{tpu_custom_call.1} parent=31 // pred_check_branch
          %285 = sbr.rel (%p282) target = $region48
        $region47: #{tpu_custom_call.1} parent=31 // pred_region
          %286 = vst [vmem:[#allocation9] sm:$0xff] 0.0
          %287 = vst [vmem:[#allocation9 + $0x8] sm:$0xff] 0.0
          %288 = vst [vmem:[#allocation9 + $0x10] sm:$0xff] 0.0
          %289 = vst [vmem:[#allocation9 + $0x18] sm:$0xff] 0.0
          %290 = vst [vmem:[#allocation10] sm:$0xff] 0.0
          %291 = vst [vmem:[#allocation10 + $0x8] sm:$0xff] 0.0
          %292 = vst [vmem:[#allocation10 + $0x10] sm:$0xff] 0.0
          %293 = vst [vmem:[#allocation10 + $0x18] sm:$0xff] 0.0
        $region48: #{tpu_custom_call.1} parent=31 // pred_fallthru
          _
        %v294 = vld [vmem:[%s239] sm:$0xff]
        %v295 = vld [vmem:[%s239 + $0x8] sm:$0xff]
        %v296 = vld [vmem:[%s239 + $0x10] sm:$0xff]
        %v297 = vld [vmem:[%s239 + $0x18] sm:$0xff]
        %v298 = vpack.c.bf16 %v296, %v294
        %v299 = vpack.c.bf16 %v297, %v295
        %300 = vst [vmem:[#allocation2] sm:$0xff] %v298
        %301 = vst [vmem:[#allocation2 + $0x8] sm:$0xff] %v299
        %v302 = vld [vmem:[%s248] sm:$0xff]
        %v303 = vld [vmem:[%s248 + $0x8] sm:$0xff]
        %v304 = vld [vmem:[%s248 + $0x10] sm:$0xff]
        %v305 = vld [vmem:[%s248 + $0x18] sm:$0xff]
        %v306 = vpack.c.bf16 %v304, %v302
        %v307 = vpack.c.bf16 %v305, %v303
        %308 = vst [vmem:[#allocation2 + $0x10] sm:$0xff] %v306
        %309 = vst [vmem:[#allocation2 + $0x18] sm:$0xff] %v307
        %v310 = vld [vmem:[#allocation8] sm:$0xf]
        %v311 = vld [vmem:[#allocation8 + $0x4] sm:$0xf]
        %v312 = vld [vmem:[#allocation8 + $0x8] sm:$0xf]
        %v313 = vld [vmem:[#allocation8 + $0xc] sm:$0xf]
        %v314 = vld [vmem:[#allocation2] sm:$0xff]
        %v315 = vld [vmem:[#allocation2 + $0x8] sm:$0xff]
        %v316 = vld [vmem:[#allocation2 + $0x10] sm:$0xff]
        %v317 = vld [vmem:[#allocation2 + $0x18] sm:$0xff]
        %v322 = vunpack.c.l.b16 %v310
        %v323 = vunpack.c.l.b16 %v311
        %v324 = vunpack.c.l.b16 %v312
        %v325 = vunpack.c.l.b16 %v313
        %v326 = vpack.c.b16 %v323, %v322
        %v327 = vpack.c.b16 %v325, %v324
        %vm328 = vcmask 261120
        %v330 = vsel %vm328, %v326, 0
        %v333 = vsel %vm328, %v327, 0
        %335 = vmatprep.subr.bf16.mxu0 %v315
        %336 = vmatpush1.bf16.msra.mxu0 %v314
        %337 = vmatprep.subr.bf16.mxu0 %v317
        %338 = vmatpush1.bf16.msra.mxu0 %v316
        %339 = vmatprep.subr.bf16.mxu0 0
        %340 = vmatpush1.bf16.msra.mxu0 0
        %341 = vmatprep.subr.bf16.mxu0 0
        %342 = vmatpush1.bf16.msra.mxu0 0
        %343 = vmatprep.subr.bf16.mxu0 0
        %344 = vmatpush1.bf16.msra.mxu0 0
        %345 = vmatprep.subr.bf16.mxu0 0
        %346 = vmatpush1.bf16.msra.mxu0 0
        %347 = vmatprep.subr.bf16.mxu0 0
        %348 = vmatpush1.bf16.msra.mxu0 0
        %349 = vmatprep.subr.bf16.mxu0 0
        %350 = vmatpush1.bf16.msra.mxu0 0
        %351 = vmatprep.subr.bf16.mxu0 0
        %352 = vmatpush1.bf16.msra.mxu0 0
        %353 = vmatprep.subr.bf16.mxu0 0
        %354 = vmatpush1.bf16.msra.mxu0 0
        %355 = vmatprep.subr.bf16.mxu0 0
        %356 = vmatpush1.bf16.msra.mxu0 0
        %357 = vmatprep.subr.bf16.mxu0 0
        %358 = vmatpush1.bf16.msra.mxu0 0
        %359 = vmatprep.subr.bf16.mxu0 0
        %360 = vmatpush1.bf16.msra.mxu0 0
        %361 = vmatprep.subr.bf16.mxu0 0
        %362 = vmatpush1.bf16.msra.mxu0 0
        %363 = vmatprep.subr.bf16.mxu0 0
        %364 = vmatpush1.bf16.msra.mxu0 0
        %365 = vmatprep.subr.bf16.mxu0 0
        %366 = vmatpush1.bf16.msra.mxu0 0
        %367 = vmatprep.mubr.bf16.mxu0 0
        %368 = vmatmul.mubr.bf16.gmra.mrb[0].mxu0 %v330
        %v369 = vpop.f32.mrb[0].mxu0
        %v370 = vadd.f32 0.0, %v369
        %v371 = vpop.f32.mrb[0].mxu0
        %v372 = vadd.f32 0.0, %v371
        %v373 = vpop.f32.mrb[0].mxu0
        %v374 = vadd.f32 0.0, %v373
        %v375 = vpop.f32.mrb[0].mxu0
        %v376 = vadd.f32 0.0, %v375
        %377 = vmatprep.mubr.bf16.mxu0 0
        %378 = vmatmul.mubr.bf16.gmra.mrb[0].mxu0 %v333
        %v379 = vpop.f32.mrb[0].mxu0
        %v380 = vadd.f32 0.0, %v379
        %v381 = vpop.f32.mrb[0].mxu0
        %v382 = vadd.f32 0.0, %v381
        %v383 = vpop.f32.mrb[0].mxu0
        %v384 = vadd.f32 0.0, %v383
        %v385 = vpop.f32.mrb[0].mxu0
        %v386 = vadd.f32 0.0, %v385
        %387 = vdwg.mxu0
        %v388 = vmul.f32 %v370, %v370
        %v389 = vmul.f32 %v374, %v374
        %v390 = vmul.f32 %v380, %v380
        %v391 = vmul.f32 %v384, %v384
        %v392 = vadd.f32 %v370, %v372
        %v393 = vadd.f32 %v374, %v376
        %v394 = vadd.f32 %v380, %v382
        %v395 = vadd.f32 %v384, %v386
        %v396 = vmul.f32 %v372, %v372
        %v397 = vmul.f32 %v376, %v376
        %v398 = vmul.f32 %v382, %v382
        %v399 = vmul.f32 %v386, %v386
        %v400 = vadd.f32 %v388, %v396
        %v401 = vadd.f32 %v389, %v397
        %v402 = vadd.f32 %v390, %v398
        %v403 = vadd.f32 %v391, %v399
        %v404 = vld [vmem:[#allocation9] sm:$0xff]
        %v405 = vld [vmem:[#allocation9 + $0x8] sm:$0xff]
        %v406 = vld [vmem:[#allocation9 + $0x10] sm:$0xff]
        %v407 = vld [vmem:[#allocation9 + $0x18] sm:$0xff]
        %v408 = vadd.f32 %v404, %v392
        %v409 = vadd.f32 %v405, %v393
        %v410 = vadd.f32 %v406, %v394
        %v411 = vadd.f32 %v407, %v395
        %412 = vst [vmem:[#allocation9] sm:$0xff] %v408
        %413 = vst [vmem:[#allocation9 + $0x8] sm:$0xff] %v409
        %414 = vst [vmem:[#allocation9 + $0x10] sm:$0xff] %v410
        %415 = vst [vmem:[#allocation9 + $0x18] sm:$0xff] %v411
        %v416 = vld [vmem:[#allocation10] sm:$0xff]
        %v417 = vld [vmem:[#allocation10 + $0x8] sm:$0xff]
        %v418 = vld [vmem:[#allocation10 + $0x10] sm:$0xff]
        %v419 = vld [vmem:[#allocation10 + $0x18] sm:$0xff]
        %v420 = vadd.f32 %v416, %v400
        %v421 = vadd.f32 %v417, %v401
        %v422 = vadd.f32 %v418, %v402
        %v423 = vadd.f32 %v419, %v403
        %424 = vst [vmem:[#allocation10] sm:$0xff] %v420
        %425 = vst [vmem:[#allocation10 + $0x8] sm:$0xff] %v421
        %426 = vst [vmem:[#allocation10 + $0x10] sm:$0xff] %v422
        %427 = vst [vmem:[#allocation10 + $0x18] sm:$0xff] %v423
        // Predicated region
        $region49: #{tpu_custom_call.1} parent=31 // pred_check
          %p428 = pneg %p126
        $region50: #{tpu_custom_call.1} parent=31 // pred_check_branch
          %430 = sbr.rel (%p428) target = $region52
        $region51: #{tpu_custom_call.1} parent=31 // pred_region
          %s432 = ssub.s32 512, 512
          %433 = vsyncadd [#allocation5], %s432
          %s434 = sshll.u32 [#allocation9], 4
          %s435 = int_to_ptr.vmem [resolvable:$true] %s434
          %440 = dma.vmem_to_hbm [thread:$0]  %s435, 512, %s3, [#allocation5], 128, 128, 8
        $region52: #{tpu_custom_call.1} parent=31 // pred_fallthru
          _
        // Predicated region
        $region53: #{tpu_custom_call.1} parent=31 // pred_check
          %p441 = pneg %p147
        $region54: #{tpu_custom_call.1} parent=31 // pred_check_branch
          %443 = sbr.rel (%p441) target = $region56
        $region55: #{tpu_custom_call.1} parent=31 // pred_region
          %s445 = ssub.s32 512, 512
          %446 = vsyncadd [#allocation11], %s445
          %s447 = sshll.u32 [#allocation10], 4
          %s448 = int_to_ptr.vmem [resolvable:$true] %s447
          %453 = dma.vmem_to_hbm [thread:$0]  %s448, 512, %s4, [#allocation11], 128, 128, 8
        $region56: #{tpu_custom_call.1} parent=31 // pred_fallthru
          _
        // Predicated region
        $region57: #{tpu_custom_call.1} parent=31 // pred_check
          %p454 = pneg %p126
        $region58: #{tpu_custom_call.1} parent=31 // pred_check_branch
          %456 = sbr.rel (%p454) target = $region60
        $region59: #{tpu_custom_call.1} parent=31 // pred_region
          %457 = dma.done [#allocation5], 512
        $region60: #{tpu_custom_call.1} parent=31 // pred_fallthru
          _
        // Predicated region
        $region61: #{tpu_custom_call.1} parent=31 // pred_check
          %p458 = pneg %p147
        $region62: #{tpu_custom_call.1} parent=31 // pred_check_branch
          %460 = sbr.rel (%p458) target = $region64
        $region63: #{tpu_custom_call.1} parent=31 // pred_region
          %461 = dma.done [#allocation11], 512
        $region64: #{tpu_custom_call.1} parent=31 // pred_fallthru
          _
      $region32: #{tpu_custom_call.1} parent=5 // pred_fallthru
        _
      %p462 = scmp.le.s32.totalorder 2, %s19
      // Predicated region
      $region65: #{tpu_custom_call.1} parent=5 // pred_check
        %p463 = pneg %p462
      $region66: #{tpu_custom_call.1} parent=5 // pred_check_branch
        %465 = sbr.rel (%p463) target = $region68
      $region67: #{tpu_custom_call.1} parent=5 // pred_region
        %s466 = ssub.s32 %s19, 2
      $region68: #{tpu_custom_call.1} parent=5 // pred_fallthru
        _
    $region6: #{tpu_custom_call.1} parent=1 // loop_footer
      %s23 = sadd.s32 1, %s19
    $region7: #{tpu_custom_call.1} parent=1 // loop_footer_branch
      %18 = sbr.rel target = $region3
    $region8: #{tpu_custom_call.1} parent=1 // loop_exit
      _
    %467 = vsyncpa [#allocation4], 1
    %s468 = scalar_lea.sflag [#allocation4], 1
    %469 = vsyncpa %s468, 1
    %470 = vsyncpa [#allocation7], 1
    %s471 = scalar_lea.sflag [#allocation7], 1
    %472 = vsyncpa %s471, 1
    %473 = vsyncpa [#allocation5], 1
    %s474 = scalar_lea.sflag [#allocation5], 1
    %475 = vsyncpa %s474, 1
    %476 = vsyncpa [#allocation11], 1

</llo_original>
